<compile_context>
chip_gen: v6e
topology: v6e:2x2x1
jax: 0.10.0
libtpu: 0.0.40
codegen_flags: <defaults>
</compile_context>

<pallas_src>
import functools

import jax
import jax.numpy as jnp
from jax import lax
from jax.experimental import pallas as pl
from jax.experimental.pallas import tpu as pltpu

_LANE = 128
_SUBLANE = 8


def _l1_partial_sum_kernel(a_ref, b_ref, o_ref, acc_ref, *, rows, row_tile,
                           inner_steps):
    """Accumulate sum(|a - b|) for one partial into an (8,128) f32 vreg.

    Grid is (num_partials, inner_steps): axis 0 parallel (one partial per
    TensorCore on v7x), axis 1 the sequential reduction over row tiles.
    """
    p = pl.program_id(0)
    i = pl.program_id(1)

    @pl.when(i == 0)
    def _():
        acc_ref[...] = jnp.zeros_like(acc_ref)

    block_row0 = (p * inner_steps + i) * row_tile

    def accumulate(mask_rows):
        # Upcast before the subtract so bf16 inputs don't lose mantissa bits.
        a = a_ref[...].astype(jnp.float32)
        b = b_ref[...].astype(jnp.float32)
        diff = jnp.abs(a - b)
        if mask_rows:
            # Edge tile: rows past the valid range hold stale VMEM data; zero
            # them explicitly (compile-time `rows` threshold).
            row_ids = block_row0 + lax.broadcasted_iota(
                jnp.int32, (row_tile, _LANE), 0)
            diff = jnp.where(row_ids < rows, diff, 0.0)
        # Fold (row_tile,128) -> (8,128): the (8,128) minor dims match the vreg
        # tile so the reshape is layout-free and the sum is pure VPU vreg adds.
        acc_ref[...] += jnp.sum(
            diff.reshape(row_tile // _SUBLANE, _SUBLANE, _LANE), axis=0)

    is_interior = block_row0 + row_tile <= rows

    @pl.when(is_interior)
    def _():
        accumulate(False)

    @pl.when(jnp.logical_not(is_interior))
    def _():
        accumulate(True)

    @pl.when(i == inner_steps - 1)
    def _():
        o_ref[...] = acc_ref[...].reshape(1, _SUBLANE, _LANE)


def _num_tensorcores():
    """2 on v7x (2 TCs/chip), otherwise 1 (v5e/v6e)."""
    try:
        kind = jax.devices()[0].device_kind.lower()
    except Exception:
        return 1
    return 2 if ("v7" in kind or "7x" in kind) else 1


def _round_up(x, m):
    return ((x + m - 1) // m) * m


def cycle_consistency_loss(real, reconstructed):
    """mean(|real - reconstructed|) computed in a Pallas TPU kernel."""
    assert real.shape == reconstructed.shape

    # Integer / wide dtypes: compute in f32 (a - b would overflow for ints).
    def _as_float(x):
        if (not jnp.issubdtype(x.dtype, jnp.floating)) or x.dtype.itemsize > 4:
            return x.astype(jnp.float32)
        return x

    real = _as_float(real)
    reconstructed = _as_float(reconstructed)

    n_elem = int(real.size)
    rows = n_elem // _LANE
    rem = n_elem - rows * _LANE

    a_flat = real.reshape(-1)
    b_flat = reconstructed.reshape(-1)

    itemsize = a_flat.dtype.itemsize
    # Dtype-aware sublane alignment: (8,128) f32, (16,128) bf16, (32,128) 8-bit.
    row_align = _SUBLANE * max(1, 4 // itemsize)

    total = jnp.float32(0.0)
    if rem > 0:
        # Sub-128-element lane remainder: tiny static slice summed in the wrapper.
        ta = a_flat[rows * _LANE:].astype(jnp.float32)
        tb = b_flat[rows * _LANE:].astype(jnp.float32)
        total = total + jnp.sum(jnp.abs(ta - tb))

    if rows < row_align:
        # TODO(synk): inputs smaller than one aligned row tile fall back to
        # plain JAX (too small for a lane-dense Pallas block).
        if rows > 0:
            ha = a_flat[: rows * _LANE].astype(jnp.float32)
            hb = b_flat[: rows * _LANE].astype(jnp.float32)
            total = total + jnp.sum(jnp.abs(ha - hb))
        return (total / jnp.float32(n_elem)).astype(jnp.float32)

    # Main body: (rows, 128). When n_elem is lane-divisible this reshape is free
    # (no HBM traffic); otherwise the prefix slice costs one copy.
    # TODO(synk): avoiding that copy for non-128-divisible sizes would require
    # manual HBM DMAs (memory_space=pl.ANY); not worth it here.
    if rem > 0:
        a2d = a_flat[: rows * _LANE].reshape(rows, _LANE)
        b2d = b_flat[: rows * _LANE].reshape(rows, _LANE)
    else:
        a2d = a_flat.reshape(rows, _LANE)
        b2d = b_flat.reshape(rows, _LANE)

    num_partials = _num_tensorcores()

    # ~2 MiB input blocks on v5e/v6e (2 inputs x 2 buffers = 8 MiB, well under
    # the 16 MiB scoped-VMEM default), ~4 MiB on v7x where the ~0.35us/step
    # grid overhead shows against its faster HBM.
    target_block_bytes = (4 << 20) if num_partials > 1 else (2 << 20)
    target_rows = max(row_align, target_block_bytes // (_LANE * itemsize))

    row_tile = min(target_rows,
                   _round_up(pl.cdiv(rows, num_partials), row_align))
    row_tile = min(row_tile, (rows // row_align) * row_align)  # never > array dim
    row_tile = max(row_tile, row_align)

    inner_steps = pl.cdiv(rows, num_partials * row_tile)

    kernel = functools.partial(_l1_partial_sum_kernel, rows=rows,
                               row_tile=row_tile, inner_steps=inner_steps)

    in_map = lambda p, i: (p * inner_steps + i, 0)

    partials = pl.pallas_call(
        kernel,
        out_shape=jax.ShapeDtypeStruct((num_partials, _SUBLANE, _LANE),
                                       jnp.float32),
        grid_spec=pltpu.PrefetchScalarGridSpec(
            num_scalar_prefetch=0,
            grid=(num_partials, inner_steps),
            in_specs=[
                pl.BlockSpec((row_tile, _LANE), in_map),
                pl.BlockSpec((row_tile, _LANE), in_map),
            ],
            out_specs=pl.BlockSpec((1, _SUBLANE, _LANE), lambda p, i: (p, 0, 0)),
            scratch_shapes=[pltpu.VMEM((_SUBLANE, _LANE), jnp.float32)],
        ),
        compiler_params=pltpu.CompilerParams(
            dimension_semantics=("parallel", "arbitrary"),
        ),
        cost_estimate=pl.CostEstimate(
            flops=3 * rows * _LANE,
            transcendentals=0,
            bytes_accessed=2 * rows * _LANE * itemsize
            + num_partials * _SUBLANE * _LANE * 4,
        ),
    )(a2d, b2d)

    total = total + jnp.sum(partials)
    return (total / jnp.float32(n_elem)).astype(jnp.float32)


class CycleConsistencyLoss:
    """Thin wrapper mirroring the (stub) PyTorch module."""

    def __call__(self, real=None, reconstructed=None):
        if real is None or reconstructed is None:
            # matches reference forward(): no args, returns None
            return None
        return cycle_consistency_loss(real, reconstructed)


if __name__ == "__main__":
    key = jax.random.PRNGKey(0)
    k1, k2 = jax.random.split(key)

    loss_mod = CycleConsistencyLoss()

    # stub-semantics path (reference forward() -> None)
    assert loss_mod() is None

    # NCHW: batch=2, channels=4, spatial=16x16 (lane-divisible -> no copies)
    real = jax.random.normal(k1, (2, 4, 16, 16), dtype=jnp.float32)
    recon = jax.random.normal(k2, (2, 4, 16, 16), dtype=jnp.float32)
    loss = jax.block_until_ready(loss_mod(real, recon))
    ref = jnp.mean(jnp.abs(real - recon))
    assert jnp.allclose(loss, ref, rtol=1e-5, atol=1e-5)

    # Non-lane-divisible shape: exercises in-kernel row mask + lane remainder.
    r2 = jax.random.normal(k1, (3, 5, 7, 11), dtype=jnp.float32)
    c2 = jax.random.normal(k2, (3, 5, 7, 11), dtype=jnp.float32)
    loss2 = jax.block_until_ready(loss_mod(r2, c2))
    ref2 = jnp.mean(jnp.abs(r2 - c2))
    assert jnp.allclose(loss2, ref2, rtol=1e-5, atol=1e-5)

    # bf16 path: dtype-aware tiling + f32 upcast before the subtract.
    r3 = jax.random.normal(k1, (4, 8, 32, 32), dtype=jnp.bfloat16)
    c3 = jax.random.normal(k2, (4, 8, 32, 32), dtype=jnp.bfloat16)
    loss3 = jax.block_until_ready(loss_mod(r3, c3))
    ref3 = jnp.mean(jnp.abs(r3.astype(jnp.float32) - c3.astype(jnp.float32)))
    assert jnp.allclose(loss3, ref3, rtol=1e-2, atol=1e-2)

    print("KERNEL_OK")
</pallas_src>

<mosaic_0001>
module attributes {stable_mosaic.version = 11 : i64} {
  func.func @_l1_partial_sum_kernel(%arg0: i32, %arg1: i32, %arg2: memref<16x128xf32, #tpu.memory_space<vmem>>, %arg3: memref<16x128xf32, #tpu.memory_space<vmem>>, %arg4: memref<1x8x128xf32, #tpu.memory_space<vmem>>, %arg5: memref<8x128xf32, #tpu.memory_space<vmem>>) attributes {dimension_semantics = [#tpu.dimension_semantics<parallel>, #tpu.dimension_semantics<arbitrary>], iteration_bounds = array<i64: 1, 1>, scalar_prefetch = 0 : i64, scratch_operands = 1 : i64, tpu.core_type = #tpu.core_type<tc>, window_params = [{transform_indices = @transform_0, window_bounds = array<i64: 16, 128>}, {transform_indices = @transform_1, window_bounds = array<i64: 16, 128>}, {transform_indices = @transform_2, window_bounds = array<i64: 1, 8, 128>}]} {
    %c0_i32 = arith.constant 0 : i32
    %0 = arith.cmpi eq, %arg1, %c0_i32 : i32
    %1 = arith.extui %0 : i1 to i32
    %c0_i32_0 = arith.constant 0 : i32
    %2 = arith.cmpi ne, %1, %c0_i32_0 : i32
    scf.if %2 {
      %cst = arith.constant 0.000000e+00 : f32
      %16 = vector.broadcast %cst : f32 to vector<8x128xf32>
      %c0 = arith.constant 0 : index
      %c0_7 = arith.constant 0 : index
      %17 = vector.load %arg5[%c0, %c0_7] : memref<8x128xf32, #tpu.memory_space<vmem>>, vector<8x128xf32>
      tpu.vector_store %arg5[%c0, %c0_7], %16 {strides = array<i32>} : memref<8x128xf32, #tpu.memory_space<vmem>>, vector<8x128xf32>,
    } else {
    }
    %c1_i32 = arith.constant 1 : i32
    %3 = arith.muli %arg0, %c1_i32 : i32
    %4 = arith.addi %3, %arg1 : i32
    %c16_i32 = arith.constant 16 : i32
    %5 = arith.muli %4, %c16_i32 : i32
    %c16_i32_1 = arith.constant 16 : i32
    %6 = arith.addi %5, %c16_i32_1 : i32
    %c16_i32_2 = arith.constant 16 : i32
    %7 = arith.cmpi sle, %6, %c16_i32_2 : i32
    %8 = arith.extui %7 : i1 to i32
    %c0_i32_3 = arith.constant 0 : i32
    %9 = arith.cmpi ne, %8, %c0_i32_3 : i32
    scf.if %9 {
      %c0 = arith.constant 0 : index
      %c0_7 = arith.constant 0 : index
      %16 = vector.load %arg2[%c0, %c0_7] : memref<16x128xf32, #tpu.memory_space<vmem>>, vector<16x128xf32>
      %c0_8 = arith.constant 0 : index
      %c0_9 = arith.constant 0 : index
      %17 = vector.load %arg3[%c0_8, %c0_9] : memref<16x128xf32, #tpu.memory_space<vmem>>, vector<16x128xf32>
      %18 = arith.subf %16, %17 : vector<16x128xf32>
      %19 = math.absf %18 : vector<16x128xf32>
      %c0_10 = arith.constant 0 : index
      %c0_11 = arith.constant 0 : index
      %20 = vector.load %arg5[%c0_10, %c0_11] : memref<8x128xf32, #tpu.memory_space<vmem>>, vector<8x128xf32>
      %21 = vector.shape_cast %19 : vector<16x128xf32> to vector<2x8x128xf32>
      %cst = arith.constant dense<0.000000e+00> : vector<8x128xf32>
      %22 = vector.multi_reduction <add>, %21, %cst [0] : vector<2x8x128xf32> to vector<8x128xf32>
      %23 = arith.addf %20, %22 : vector<8x128xf32>
      %c0_12 = arith.constant 0 : index
      %c0_13 = arith.constant 0 : index
      %24 = vector.load %arg5[%c0_12, %c0_13] : memref<8x128xf32, #tpu.memory_space<vmem>>, vector<8x128xf32>
      tpu.vector_store %arg5[%c0_12, %c0_13], %23 {strides = array<i32>} : memref<8x128xf32, #tpu.memory_space<vmem>>, vector<8x128xf32>,
    } else {
    }
    %true = arith.constant true
    %10 = arith.xori %7, %true : i1
    %11 = arith.extui %10 : i1 to i32
    %c0_i32_4 = arith.constant 0 : i32
    %12 = arith.cmpi ne, %11, %c0_i32_4 : i32
    scf.if %12 {
      %c0 = arith.constant 0 : index
      %c0_7 = arith.constant 0 : index
      %16 = vector.load %arg2[%c0, %c0_7] : memref<16x128xf32, #tpu.memory_space<vmem>>, vector<16x128xf32>
      %c0_8 = arith.constant 0 : index
      %c0_9 = arith.constant 0 : index
      %17 = vector.load %arg3[%c0_8, %c0_9] : memref<16x128xf32, #tpu.memory_space<vmem>>, vector<16x128xf32>
      %18 = arith.subf %16, %17 : vector<16x128xf32>
      %19 = math.absf %18 : vector<16x128xf32>
      %20 = tpu.iota {dimensions = array<i32: 0>} : vector<16x128xi32>
      %21 = vector.broadcast %5 : i32 to vector<16x128xi32>
      %22 = arith.addi %21, %20 : vector<16x128xi32>
      %c16_i32_10 = arith.constant 16 : i32
      %23 = vector.broadcast %c16_i32_10 : i32 to vector<16x128xi32>
      %24 = arith.cmpi slt, %22, %23 : vector<16x128xi32>
      %cst = arith.constant 0.000000e+00 : f32
      %25 = vector.broadcast %cst : f32 to vector<16x128xf32>
      %26 = arith.select %24, %19, %25 : vector<16x128xi1>, vector<16x128xf32>
      %c0_11 = arith.constant 0 : index
      %c0_12 = arith.constant 0 : index
      %27 = vector.load %arg5[%c0_11, %c0_12] : memref<8x128xf32, #tpu.memory_space<vmem>>, vector<8x128xf32>
      %28 = vector.shape_cast %26 : vector<16x128xf32> to vector<2x8x128xf32>
      %cst_13 = arith.constant dense<0.000000e+00> : vector<8x128xf32>
      %29 = vector.multi_reduction <add>, %28, %cst_13 [0] : vector<2x8x128xf32> to vector<8x128xf32>
      %30 = arith.addf %27, %29 : vector<8x128xf32>
      %c0_14 = arith.constant 0 : index
      %c0_15 = arith.constant 0 : index
      %31 = vector.load %arg5[%c0_14, %c0_15] : memref<8x128xf32, #tpu.memory_space<vmem>>, vector<8x128xf32>
      tpu.vector_store %arg5[%c0_14, %c0_15], %30 {strides = array<i32>} : memref<8x128xf32, #tpu.memory_space<vmem>>, vector<8x128xf32>,
    } else {
    }
    %c0_i32_5 = arith.constant 0 : i32
    %13 = arith.cmpi eq, %arg1, %c0_i32_5 : i32
    %14 = arith.extui %13 : i1 to i32
    %c0_i32_6 = arith.constant 0 : i32
    %15 = arith.cmpi ne, %14, %c0_i32_6 : i32
    scf.if %15 {
      %c0 = arith.constant 0 : index
      %c0_7 = arith.constant 0 : index
      %16 = vector.load %arg5[%c0, %c0_7] : memref<8x128xf32, #tpu.memory_space<vmem>>, vector<8x128xf32>
      %17 = vector.shape_cast %16 : vector<8x128xf32> to vector<1x8x128xf32>
      %c0_8 = arith.constant 0 : index
      %c0_9 = arith.constant 0 : index
      %c0_10 = arith.constant 0 : index
      %18 = vector.load %arg4[%c0_8, %c0_9, %c0_10] : memref<1x8x128xf32, #tpu.memory_space<vmem>>, vector<1x8x128xf32>
      tpu.vector_store %arg4[%c0_8, %c0_9, %c0_10], %17 {strides = array<i32>} : memref<1x8x128xf32, #tpu.memory_space<vmem>>, vector<1x8x128xf32>,
    } else {
    }
    return
  }
  func.func @transform_0(%arg0: i32, %arg1: i32) -> (i32, i32) {
    %c1_i32 = arith.constant 1 : i32
    %0 = arith.muli %arg0, %c1_i32 : i32
    %1 = arith.addi %0, %arg1 : i32
    %c0_i32 = arith.constant 0 : i32
    %c0_i32_0 = arith.constant 0 : i32
    return %1, %c0_i32 : i32, i32
  }
  func.func @transform_1(%arg0: i32, %arg1: i32) -> (i32, i32) {
    %c1_i32 = arith.constant 1 : i32
    %0 = arith.muli %arg0, %c1_i32 : i32
    %1 = arith.addi %0, %arg1 : i32
    %c0_i32 = arith.constant 0 : i32
    %c0_i32_0 = arith.constant 0 : i32
    return %1, %c0_i32 : i32, i32
  }
  func.func @transform_2(%arg0: i32, %arg1: i32) -> (i32, i32, i32) {
    %c0_i32 = arith.constant 0 : i32
    %c0_i32_0 = arith.constant 0 : i32
    %c0_i32_1 = arith.constant 0 : i32
    return %arg0, %c0_i32, %c0_i32_0 : i32, i32, i32
  }
}

</mosaic_0001>

<llo_original>
// kernel: tpu_custom_call.1
$region0: #{tpu_custom_call.1}
  #allocation0 [shape = 'u32[]', space=smem, size = 0x4, offset = 0x4, fixed_abs, tag = 'smem constant byte address 0x4 - core index']
  #allocation1 [shape = 'u32[144,128]{1,0:T(1,128)}', space=vmem, size = 0x12000, scoped, tag = 'internal scratch']
  #allocation2 [shape = 'f32[8,128]{1,0:T(8,128)}', space=vmem, size = 0x1000, scoped, tag = 'scratch operand']
  %s0 = inlined_call_operand.hbm [shape: f32[16,128], index: 0, kind: input, shape index: {}]
  %s1 = inlined_call_operand.hbm [shape: f32[16,128], index: 1, kind: input, shape index: {}]
  %s2 = inlined_call_operand.hbm [shape: f32[1,8,128], index: 2, kind: output, shape index: {}]
  %s3 = sld [smem:[#allocation0]]
  $region42: #{tpu_custom_call.1} parent=0
    _
  %s5 = ssub.s32 1, %s3
  %s6 = scalar_select 0, %s5, %s3
  $region1: #{tpu_custom_call.1} parent=0
    #allocation3 [shape = 'u8[8192]{0}', space=vmem, size = 0x2000, scoped, tag = 'input window, operand 0, single buffered']
    #allocation4 [shape = 's32[1]{0}', space=sflag, size = 0x4, scoped, tag = 'scoped memory for tpu_custom_call.1']
    #allocation5 [shape = 's32[1]{0}', space=sflag, size = 0x4, scoped, tag = 'scoped memory for tpu_custom_call.1']
    #allocation6 [shape = 'u8[8192]{0}', space=vmem, size = 0x2000, scoped, tag = 'input window, operand 1, single buffered']
    #allocation7 [shape = 's32[1]{0}', space=sflag, size = 0x4, scoped, tag = 'scoped memory for tpu_custom_call.1']
    #allocation8 [shape = 'u8[4096]{0}', space=vmem, size = 0x1000, scoped, tag = 'output window, operand 0, single buffered']
    %7 = vsyncpa [#allocation4], 0
    %8 = vsyncpa [#allocation7], 0
    %9 = vsyncpa [#allocation5], 0
    // Predicated region
    $region2: #{tpu_custom_call.1} parent=1 // pred_check
      _
    $region3: #{tpu_custom_call.1} parent=1 // pred_check_branch
      %11 = sbr.rel (0) target = $region5
    $region4: #{tpu_custom_call.1} parent=1 // pred_region
      %s12 = sadd.s32 0, 0
      %s13 = smul.u32 2, %s12
      %s15 = ssub.s32 256, 256
      %16 = vsyncadd [#allocation4], %s15
      %s17 = smul.addr %s13, 128
      %s18 = scalar_lea.hbm %s0, %s17
      %s19 = sshll.u32 [#allocation3], 4
      %s20 = int_to_ptr.vmem [resolvable:$true] %s19
      %25 = dma.hbm_to_vmem [thread:$0]  %s18, 256, %s20, [#allocation4], 128, 128, 8
    $region5: #{tpu_custom_call.1} parent=1 // pred_fallthru
      _
    // Predicated region
    $region6: #{tpu_custom_call.1} parent=1 // pred_check
      _
    $region7: #{tpu_custom_call.1} parent=1 // pred_check_branch
      %27 = sbr.rel (0) target = $region9
    $region8: #{tpu_custom_call.1} parent=1 // pred_region
      %s28 = sadd.s32 0, 0
      %s29 = smul.u32 2, %s28
      %s31 = ssub.s32 256, 256
      %32 = vsyncadd [#allocation7], %s31
      %s33 = smul.addr %s29, 128
      %s34 = scalar_lea.hbm %s1, %s33
      %s35 = sshll.u32 [#allocation6], 4
      %s36 = int_to_ptr.vmem [resolvable:$true] %s35
      %41 = dma.hbm_to_vmem [thread:$0]  %s34, 256, %s36, [#allocation7], 128, 128, 8
    $region9: #{tpu_custom_call.1} parent=1 // pred_fallthru
      _
    // Predicated region
    $region10: #{tpu_custom_call.1} parent=1 // pred_check
      _
    $region11: #{tpu_custom_call.1} parent=1 // pred_check_branch
      %43 = sbr.rel (0) target = $region13
    $region12: #{tpu_custom_call.1} parent=1 // pred_region
      %44 = dma.done [#allocation4], 256
    $region13: #{tpu_custom_call.1} parent=1 // pred_fallthru
      _
    // Predicated region
    $region14: #{tpu_custom_call.1} parent=1 // pred_check
      _
    $region15: #{tpu_custom_call.1} parent=1 // pred_check_branch
      %46 = sbr.rel (0) target = $region17
    $region16: #{tpu_custom_call.1} parent=1 // pred_region
      %47 = dma.done [#allocation7], 256
    $region17: #{tpu_custom_call.1} parent=1 // pred_fallthru
      _
    %s48 = sadd.s32 0, 0
    %s49 = smul.u32 2, %s48
    %s50 = sadd.s32 0, 0
    %s51 = smul.u32 2, %s50
    %p52 = scmp.eq.s32.totalorder 0, 0
    // Predicated region
    $region18: #{tpu_custom_call.1} parent=1 // pred_check
      %p53 = pneg %p52
    $region19: #{tpu_custom_call.1} parent=1 // pred_check_branch
      %55 = sbr.rel (%p53) target = $region21
    $region20: #{tpu_custom_call.1} parent=1 // pred_region
      %56 = vst [vmem:[#allocation2] sm:$0xff] 0.0
    $region21: #{tpu_custom_call.1} parent=1 // pred_fallthru
      _
    %s57 = sadd.s32 0, 0
    %s58 = smul.u32 %s57, 16
    %s59 = sadd.s32 %s58, 16
    %p60 = scmp.le.s32.totalorder %s59, 16
    // Predicated region
    $region22: #{tpu_custom_call.1} parent=1 // pred_check
      %p61 = pneg %p60
    $region23: #{tpu_custom_call.1} parent=1 // pred_check_branch
      %63 = sbr.rel (%p61) target = $region25
    $region24: #{tpu_custom_call.1} parent=1 // pred_region
      %v64 = vld [vmem:[#allocation3] sm:$0xff]
      %v65 = vld [vmem:[#allocation3 + $0x8] sm:$0xff]
      %v66 = vld [vmem:[#allocation6] sm:$0xff]
      %v67 = vld [vmem:[#allocation6 + $0x8] sm:$0xff]
      %v68 = vsub.f32 %v64, %v66
      %v69 = vsub.f32 %v65, %v67
      %v70 = vand.u32 2147483647, %v68
      %v71 = vand.u32 2147483647, %v69
      %v72 = vld [vmem:[#allocation2] sm:$0xff]
      %v73 = vadd.f32 %v70, %v71
      %v74 = vadd.f32 %v72, %v73
      %75 = vst [vmem:[#allocation2] sm:$0xff] %v74
    $region25: #{tpu_custom_call.1} parent=1 // pred_fallthru
      _
    %p76 = scmp.gt.s32.totalorder %s59, 16
    // Predicated region
    $region26: #{tpu_custom_call.1} parent=1 // pred_check
      %p77 = pneg %p76
    $region27: #{tpu_custom_call.1} parent=1 // pred_check_branch
      %79 = sbr.rel (%p77) target = $region29
    $region28: #{tpu_custom_call.1} parent=1 // pred_region
      %v80 = vld [vmem:[#allocation3] sm:$0xff]
      %v81 = vld [vmem:[#allocation3 + $0x8] sm:$0xff]
      %v82 = vld [vmem:[#allocation6] sm:$0xff]
      %v83 = vld [vmem:[#allocation6 + $0x8] sm:$0xff]
      %v84 = vsub.f32 %v80, %v82
      %v85 = vsub.f32 %v81, %v83
      %v86 = vand.u32 2147483647, %v84
      %v87 = vand.u32 2147483647, %v85
      %v88 = vlaneseq
      %v89 = vshrl.u32 %v88, 7
      %v90 = vadd.s32 %v89, 8
      %v91 = vstv %s58
      %v92 = vadd.s32 %v91, %v89
      %v93 = vadd.s32 %v91, %v90
      %vm94 = vcmp.lt.s32.totalorder %v92, 16
      %vm95 = vcmp.lt.s32.totalorder %v93, 16
      %v96 = vsel %vm94, %v86, 0.0
      %v97 = vsel %vm95, %v87, 0.0
      %v98 = vld [vmem:[#allocation2] sm:$0xff]
      %v99 = vadd.f32 %v96, %v97
      %v100 = vadd.f32 %v98, %v99
      %101 = vst [vmem:[#allocation2] sm:$0xff] %v100
    $region29: #{tpu_custom_call.1} parent=1 // pred_fallthru
      _
    // Predicated region
    $region30: #{tpu_custom_call.1} parent=1 // pred_check
      %p102 = pneg %p52
    $region31: #{tpu_custom_call.1} parent=1 // pred_check_branch
      %104 = sbr.rel (%p102) target = $region33
    $region32: #{tpu_custom_call.1} parent=1 // pred_region
      %v105 = vld [vmem:[#allocation2] sm:$0xff]
      %106 = vst [vmem:[#allocation8] sm:$0xff] %v105
    $region33: #{tpu_custom_call.1} parent=1 // pred_fallthru
      _
    // Predicated region
    $region34: #{tpu_custom_call.1} parent=1 // pred_check
      _
    $region35: #{tpu_custom_call.1} parent=1 // pred_check_branch
      %108 = sbr.rel (0) target = $region37
    $region36: #{tpu_custom_call.1} parent=1 // pred_region
      %s110 = ssub.s32 128, 128
      %111 = vsyncadd [#allocation5], %s110
      %s113 = sshll.u32 [#allocation8], 4
      %s114 = int_to_ptr.vmem [resolvable:$true] %s113
      %116 = dma.vmem_to_hbm [thread:$0]  %s114, 128, %s2, [#allocation5]
    $region37: #{tpu_custom_call.1} parent=1 // pred_fallthru
      _
    // Predicated region
    $region38: #{tpu_custom_call.1} parent=1 // pred_check
      _
    $region39: #{tpu_custom_call.1} parent=1 // pred_check_branch
      %118 = sbr.rel (0) target = $region41
    $region40: #{tpu_custom_call.1} parent=1 // pred_region
      %119 = dma.done [#allocation5], 128
    $region41: #{tpu_custom_call.1} parent=1 // pred_fallthru
      _
    %120 = vsyncpa [#allocation4], 1
    %121 = vsyncpa [#allocation7], 1
    %122 = vsyncpa [#allocation5], 1

</llo_original>
